<compile_context>
chip_gen: v5e
topology: v5e:2x2
jax: 0.10.0
libtpu: 0.0.40
codegen_flags: <defaults>
</compile_context>

<pallas_src>
import functools

import jax
import jax.numpy as jnp
from jax.experimental import pallas as pl
from jax.experimental.pallas import tpu as pltpu


def _round_up(x, m):
    return (x + m - 1) // m * m


def _vmem_capacity_bytes():
    # Per-generation VMEM (v5e/v6e: 128 MiB, v7x: 64 MiB). Fall back to the
    # smallest (v7x) if the trace-time query is unavailable.
    try:
        return int(pltpu.get_tpu_info().vmem_capacity_bytes)
    except Exception:
        return 64 * 1024 * 1024


# ----------------------------------------------------------------------------
# Fused kernel: full MLP for one batch tile.
#   refs = (x_ref, w0, b0, w1, b1, ..., w_{L-1}, b_{L-1}, o_ref)
# ----------------------------------------------------------------------------
def _fused_mlp_kernel(*refs, num_layers, activation, last_activation,
                      compute_dtype):
    x_ref = refs[0]
    o_ref = refs[1 + 2 * num_layers]

    h = x_ref[...]                                     # bf16 [tm, P0]
    for l in range(num_layers):                        # static unroll
        w_ref = refs[1 + 2 * l]                        # bf16 [Pin, Pout]
        b_ref = refs[2 + 2 * l]                        # f32  [1,  Pout]
        acc = jnp.dot(h, w_ref[...],
                      preferred_element_type=jnp.float32)   # MXU, f32 acc
        acc = acc + b_ref[...]                         # broadcast over batch
        if l == num_layers - 1:
            o_ref[...] = last_activation(acc).astype(o_ref.dtype)
        else:
            # Carry intermediate activations in bf16 between layers.
            h = activation(acc).astype(compute_dtype)


# ----------------------------------------------------------------------------
# Parameter setup (mirrors nn.Linear init), padding/casting done once.
# ----------------------------------------------------------------------------
def init_mlp_params(key, layers_n):
    """Unpadded f32 params, uniform(-1/sqrt(fan_in), +1/sqrt(fan_in)) like
    nn.Linear; weights stored transposed as [fan_in, fan_out]."""
    params = []
    for (fan_in, fan_out) in zip(layers_n[:-1], layers_n[1:]):
        key, kw, kb = jax.random.split(key, 3)
        bound = 1.0 / (fan_in ** 0.5)
        w_t = jax.random.uniform(kw, (fan_in, fan_out), jnp.float32,
                                 minval=-bound, maxval=bound)
        b = jax.random.uniform(kb, (fan_out,), jnp.float32,
                               minval=-bound, maxval=bound)
        params.append((w_t, b))
    return params


def prepare_params(params, compute_dtype=jnp.bfloat16):
    """Zero-pad feature dims to multiples of 128 and cast weights to the MXU
    dtype — done once, outside the per-call path."""
    prepared = []
    for (w_t, b) in params:
        fin, fout = w_t.shape
        pin, pout = _round_up(fin, 128), _round_up(fout, 128)
        w_p = jnp.zeros((pin, pout), compute_dtype)
        w_p = w_p.at[:fin, :fout].set(w_t.astype(compute_dtype))
        b_p = jnp.zeros((1, pout), jnp.float32).at[0, :fout].set(b)
        prepared.append((w_p, b_p))
    return prepared


# ----------------------------------------------------------------------------
# Forward pass
# ----------------------------------------------------------------------------
def mlp_net_forward(prepared_params, x, activation, last_activation,
                    out_features, *, compute_dtype=jnp.bfloat16):
    num_layers = len(prepared_params)
    B, F0 = x.shape
    P0 = prepared_params[0][0].shape[0]
    P_last = prepared_params[-1][0].shape[1]
    assert F0 <= P0 and out_features <= P_last

    # Batch tiling: one "parallel" grid axis.  Large tiles amortize the
    # ~0.35 us per-grid-step overhead; bf16 packing wants sublane multiples
    # of 16.
    tm = min(512, _round_up(B, 16))
    B_pad = _round_up(B, tm)
    # v7x megacore balance: prefer >= 2 grid steps so both TensorCores get
    # work (only when halving keeps tm a bf16-friendly multiple of 16).
    if B_pad // tm < 2 and tm >= 32:
        tm //= 2
        B_pad = 2 * tm

    # Stream x in bf16: the activation stream is the only operand scaling with
    # B, so halving its bytes halves the dominant HBM traffic.
    x_p = jnp.pad(x.astype(compute_dtype), ((0, B_pad - B), (0, P0 - F0)))

    flat_inputs = [x_p]
    in_specs = [pl.BlockSpec((tm, P0), lambda i: (i, 0))]
    flops = 0
    weight_bytes = 0
    bytes_accessed = int(x_p.size) * x_p.dtype.itemsize
    for (w_p, b_p) in prepared_params:
        pin, pout = w_p.shape
        flat_inputs += [w_p, b_p]
        in_specs += [
            pl.BlockSpec((pin, pout), lambda i: (0, 0)),   # VMEM-resident
            pl.BlockSpec((1, pout), lambda i: (0, 0)),
        ]
        flops += 2 * B_pad * pin * pout
        layer_bytes = (int(w_p.size) * w_p.dtype.itemsize
                       + int(b_p.size) * b_p.dtype.itemsize)
        weight_bytes += layer_bytes
        bytes_accessed += layer_bytes

    out_dtype = compute_dtype            # bf16 writeback (tanh is bf16-safe)
    itemsize = jnp.dtype(compute_dtype).itemsize
    bytes_accessed += B_pad * P_last * itemsize

    # VMEM budget: streamed x/out tiles are double-buffered by the pipeline,
    # and the constant-index weight blocks also get 2 buffers by default; add
    # slack for compiler temporaries.  Capacity is queried per generation so
    # the guard is valid on v7x's 64 MiB VMEM as well as v5e/v6e's 128 MiB.
    # TODO(synk): single-buffer resident weights via pipeline_mode=pl.Buffered(1)
    # and add emit_pipeline K/N weight tiling once layers outgrow VMEM.
    x_tile_bytes = tm * P0 * itemsize
    out_tile_bytes = tm * P_last * itemsize
    vmem_capacity = _vmem_capacity_bytes()
    vmem_needed = (2 * (x_tile_bytes + out_tile_bytes) + 2 * weight_bytes
                   + (1 << 20))
    assert vmem_needed < vmem_capacity // 2, \
        "layers too large for fully fused kernel"
    # Explicit scoped-VMEM limit (v5e default is only 16 MiB), with headroom
    # but capped well below physical capacity.
    vmem_limit = min(vmem_capacity * 3 // 4,
                     max(32 * 1024 * 1024, 2 * vmem_needed))

    kernel = functools.partial(
        _fused_mlp_kernel, num_layers=num_layers, activation=activation,
        last_activation=last_activation, compute_dtype=compute_dtype)

    out_padded = pl.pallas_call(
        kernel,
        out_shape=jax.ShapeDtypeStruct((B_pad, P_last), out_dtype),
        grid=(B_pad // tm,),
        in_specs=in_specs,
        out_specs=pl.BlockSpec((tm, P_last), lambda i: (i, 0)),
        compiler_params=pltpu.CompilerParams(
            dimension_semantics=("parallel",),
            vmem_limit_bytes=int(vmem_limit)),
        cost_estimate=pl.CostEstimate(
            flops=flops,
            transcendentals=B_pad * P_last,
            bytes_accessed=bytes_accessed),
    )(*flat_inputs)

    # External interface stays f32 (like the PyTorch module); the bf16 slab is
    # only the HBM writeback format.
    return out_padded[:B, :out_features].astype(jnp.float32)


# ----------------------------------------------------------------------------
# Demo
# ----------------------------------------------------------------------------
if __name__ == "__main__":
    layers_n = [32, 64, 64, 16]
    activation = jax.nn.relu          # hidden layers (F.relu)
    last_activation = jnp.tanh        # output layer (torch.tanh)

    key = jax.random.PRNGKey(0)
    key, kx = jax.random.split(key)
    batch = 8
    x = jax.random.normal(kx, (batch, layers_n[0]), jnp.float32)

    params = init_mlp_params(key, layers_n)
    prepared = prepare_params(params)

    out = mlp_net_forward(prepared, x, activation, last_activation,
                          out_features=layers_n[-1])
    out = jax.block_until_ready(out)
    assert out.shape == (batch, layers_n[-1]), out.shape

    # Reference 1: mirror the kernel's math (bf16 streams / MXU, f32 acc,
    # bf16 inter-layer activations, bf16 output).
    ref = x.astype(jnp.bfloat16)
    for l, (w_t, b) in enumerate(params):
        acc = jnp.dot(ref, w_t.astype(jnp.bfloat16),
                      preferred_element_type=jnp.float32) + b
        if l == len(params) - 1:
            ref = last_activation(acc).astype(jnp.bfloat16)
        else:
            ref = activation(acc).astype(jnp.bfloat16)
    ref = ref.astype(jnp.float32)
    assert jnp.allclose(out, ref, atol=1e-2, rtol=1e-2), \
        float(jnp.max(jnp.abs(out - ref)))

    # Reference 2: full-f32 module semantics (looser tolerance for bf16 path).
    ref32 = x
    for l, (w_t, b) in enumerate(params):
        y = ref32 @ w_t + b
        ref32 = last_activation(y) if l == len(params) - 1 else activation(y)
    assert jnp.allclose(out, ref32, atol=4e-2, rtol=4e-2), \
        float(jnp.max(jnp.abs(out - ref32)))

    print("KERNEL_OK")
</pallas_src>

<mosaic_0001>
module attributes {stable_mosaic.version = 11 : i64} {
  func.func @_fused_mlp_kernel(%arg0: i32, %arg1: memref<16x128xbf16, #tpu.memory_space<vmem>>, %arg2: memref<128x128xbf16, #tpu.memory_space<vmem>>, %arg3: memref<1x128xf32, #tpu.memory_space<vmem>>, %arg4: memref<128x128xbf16, #tpu.memory_space<vmem>>, %arg5: memref<1x128xf32, #tpu.memory_space<vmem>>, %arg6: memref<128x128xbf16, #tpu.memory_space<vmem>>, %arg7: memref<1x128xf32, #tpu.memory_space<vmem>>, %arg8: memref<16x128xbf16, #tpu.memory_space<vmem>>) attributes {dimension_semantics = [#tpu.dimension_semantics<parallel>], iteration_bounds = array<i64: 1>, scalar_prefetch = 0 : i64, scratch_operands = 0 : i64, tpu.core_type = #tpu.core_type<tc>, window_params = [{transform_indices = @transform_0, window_bounds = array<i64: 16, 128>}, {pipeline_mode = #tpu.pipeline_mode<synchronous>, transform_indices = @transform_1, window_bounds = array<i64: 128, 128>}, {pipeline_mode = #tpu.pipeline_mode<synchronous>, transform_indices = @transform_2, window_bounds = array<i64: 1, 128>}, {pipeline_mode = #tpu.pipeline_mode<synchronous>, transform_indices = @transform_3, window_bounds = array<i64: 128, 128>}, {pipeline_mode = #tpu.pipeline_mode<synchronous>, transform_indices = @transform_4, window_bounds = array<i64: 1, 128>}, {pipeline_mode = #tpu.pipeline_mode<synchronous>, transform_indices = @transform_5, window_bounds = array<i64: 128, 128>}, {pipeline_mode = #tpu.pipeline_mode<synchronous>, transform_indices = @transform_6, window_bounds = array<i64: 1, 128>}, {transform_indices = @transform_7, window_bounds = array<i64: 16, 128>}]} {
    %c0 = arith.constant 0 : index
    %c0_0 = arith.constant 0 : index
    %0 = vector.load %arg1[%c0, %c0_0] : memref<16x128xbf16, #tpu.memory_space<vmem>>, vector<16x128xbf16>
    %c0_1 = arith.constant 0 : index
    %c0_2 = arith.constant 0 : index
    %1 = vector.load %arg2[%c0_1, %c0_2] : memref<128x128xbf16, #tpu.memory_space<vmem>>, vector<128x128xbf16>
    %cst = arith.constant dense<0.000000e+00> : vector<16x128xf32>
    %2 = tpu.matmul %0, %1, %cst {dimension_numbers = #tpu.dot_dimension_numbers<[1], [0], [0], [1], [0, 0, 1, 1], [], []>} : vector<16x128xbf16>, vector<128x128xbf16>, vector<16x128xf32> -> vector<16x128xf32>
    %c0_3 = arith.constant 0 : index
    %c0_4 = arith.constant 0 : index
    %3 = vector.load %arg3[%c0_3, %c0_4] : memref<1x128xf32, #tpu.memory_space<vmem>>, vector<1x128xf32>
    %4 = vector.broadcast %3 : vector<1x128xf32> to vector<16x128xf32>
    %5 = arith.addf %2, %4 : vector<16x128xf32>
    %cst_5 = arith.constant 0.000000e+00 : f32
    %6 = vector.broadcast %cst_5 : f32 to vector<16x128xf32>
    %7 = arith.maximumf %5, %6 : vector<16x128xf32>
    %8 = arith.truncf %7 : vector<16x128xf32> to vector<16x128xbf16>
    %c0_6 = arith.constant 0 : index
    %c0_7 = arith.constant 0 : index
    %9 = vector.load %arg4[%c0_6, %c0_7] : memref<128x128xbf16, #tpu.memory_space<vmem>>, vector<128x128xbf16>
    %cst_8 = arith.constant dense<0.000000e+00> : vector<16x128xf32>
    %10 = tpu.matmul %8, %9, %cst_8 {dimension_numbers = #tpu.dot_dimension_numbers<[1], [0], [0], [1], [0, 0, 1, 1], [], []>} : vector<16x128xbf16>, vector<128x128xbf16>, vector<16x128xf32> -> vector<16x128xf32>
    %c0_9 = arith.constant 0 : index
    %c0_10 = arith.constant 0 : index
    %11 = vector.load %arg5[%c0_9, %c0_10] : memref<1x128xf32, #tpu.memory_space<vmem>>, vector<1x128xf32>
    %12 = vector.broadcast %11 : vector<1x128xf32> to vector<16x128xf32>
    %13 = arith.addf %10, %12 : vector<16x128xf32>
    %cst_11 = arith.constant 0.000000e+00 : f32
    %14 = vector.broadcast %cst_11 : f32 to vector<16x128xf32>
    %15 = arith.maximumf %13, %14 : vector<16x128xf32>
    %16 = arith.truncf %15 : vector<16x128xf32> to vector<16x128xbf16>
    %c0_12 = arith.constant 0 : index
    %c0_13 = arith.constant 0 : index
    %17 = vector.load %arg6[%c0_12, %c0_13] : memref<128x128xbf16, #tpu.memory_space<vmem>>, vector<128x128xbf16>
    %cst_14 = arith.constant dense<0.000000e+00> : vector<16x128xf32>
    %18 = tpu.matmul %16, %17, %cst_14 {dimension_numbers = #tpu.dot_dimension_numbers<[1], [0], [0], [1], [0, 0, 1, 1], [], []>} : vector<16x128xbf16>, vector<128x128xbf16>, vector<16x128xf32> -> vector<16x128xf32>
    %c0_15 = arith.constant 0 : index
    %c0_16 = arith.constant 0 : index
    %19 = vector.load %arg7[%c0_15, %c0_16] : memref<1x128xf32, #tpu.memory_space<vmem>>, vector<1x128xf32>
    %20 = vector.broadcast %19 : vector<1x128xf32> to vector<16x128xf32>
    %21 = arith.addf %18, %20 : vector<16x128xf32>
    %22 = math.tanh %21 : vector<16x128xf32>
    %23 = arith.truncf %22 : vector<16x128xf32> to vector<16x128xbf16>
    %c0_17 = arith.constant 0 : index
    %c0_18 = arith.constant 0 : index
    %24 = vector.load %arg8[%c0_17, %c0_18] : memref<16x128xbf16, #tpu.memory_space<vmem>>, vector<16x128xbf16>
    tpu.vector_store %arg8[%c0_17, %c0_18], %23 {strides = array<i32>} : memref<16x128xbf16, #tpu.memory_space<vmem>>, vector<16x128xbf16>,
    return
  }
  func.func @transform_0(%arg0: i32) -> (i32, i32) {
    %c0_i32 = arith.constant 0 : i32
    %c0_i32_0 = arith.constant 0 : i32
    return %arg0, %c0_i32 : i32, i32
  }
  func.func @transform_1(%arg0: i32) -> (i32, i32) {
    %c0_i32 = arith.constant 0 : i32
    %c0_i32_0 = arith.constant 0 : i32
    %c0_i32_1 = arith.constant 0 : i32
    return %c0_i32, %c0_i32_0 : i32, i32
  }
  func.func @transform_2(%arg0: i32) -> (i32, i32) {
    %c0_i32 = arith.constant 0 : i32
    %c0_i32_0 = arith.constant 0 : i32
    %c0_i32_1 = arith.constant 0 : i32
    return %c0_i32, %c0_i32_0 : i32, i32
  }
  func.func @transform_3(%arg0: i32) -> (i32, i32) {
    %c0_i32 = arith.constant 0 : i32
    %c0_i32_0 = arith.constant 0 : i32
    %c0_i32_1 = arith.constant 0 : i32
    return %c0_i32, %c0_i32_0 : i32, i32
  }
  func.func @transform_4(%arg0: i32) -> (i32, i32) {
    %c0_i32 = arith.constant 0 : i32
    %c0_i32_0 = arith.constant 0 : i32
    %c0_i32_1 = arith.constant 0 : i32
    return %c0_i32, %c0_i32_0 : i32, i32
  }
  func.func @transform_5(%arg0: i32) -> (i32, i32) {
    %c0_i32 = arith.constant 0 : i32
    %c0_i32_0 = arith.constant 0 : i32
    %c0_i32_1 = arith.constant 0 : i32
    return %c0_i32, %c0_i32_0 : i32, i32
  }
  func.func @transform_6(%arg0: i32) -> (i32, i32) {
    %c0_i32 = arith.constant 0 : i32
    %c0_i32_0 = arith.constant 0 : i32
    %c0_i32_1 = arith.constant 0 : i32
    return %c0_i32, %c0_i32_0 : i32, i32
  }
  func.func @transform_7(%arg0: i32) -> (i32, i32) {
    %c0_i32 = arith.constant 0 : i32
    %c0_i32_0 = arith.constant 0 : i32
    return %arg0, %c0_i32 : i32, i32
  }
}

</mosaic_0001>

<llo_original>
// kernel: tpu_custom_call.1
$region0: #{tpu_custom_call.1}
  #allocation0 [shape = 'u32[]', space=smem, size = 0x4, offset = 0x4, fixed_abs, tag = 'smem constant byte address 0x4 - core index']
  #allocation1 [shape = 'u32[72,128]{1,0:T(1,128)}', space=vmem, size = 0x9000, scoped, tag = 'internal scratch']
  %s0 = inlined_call_operand.hbm [shape: bf16[16,128], index: 0, kind: input, shape index: {}]
  %s1 = inlined_call_operand.hbm [shape: bf16[128,128], index: 1, kind: input, shape index: {}]
  %s2 = inlined_call_operand.vmem [shape: f32[1,128], index: 2, kind: input, shape index: {}]
  %s3 = inlined_call_operand.hbm [shape: bf16[128,128], index: 3, kind: input, shape index: {}]
  %s4 = inlined_call_operand.vmem [shape: f32[1,128], index: 4, kind: input, shape index: {}]
  %s5 = inlined_call_operand.hbm [shape: bf16[128,128], index: 5, kind: input, shape index: {}]
  %s6 = inlined_call_operand.vmem [shape: f32[1,128], index: 6, kind: input, shape index: {}]
  %s7 = inlined_call_operand.hbm [shape: bf16[16,128], index: 7, kind: output, shape index: {}]
  %s8 = sld [smem:[#allocation0]]
  $region54: #{tpu_custom_call.1} parent=0
    _
  %s10 = ssub.s32 1, %s8
  %s11 = scalar_select 0, %s10, %s8
  $region1: #{tpu_custom_call.1} parent=0
    #allocation2 [shape = 'u8[4096]{0}', space=vmem, size = 0x1000, scoped, tag = 'input window, operand 0, single buffered']
    #allocation3 [shape = 's32[1]{0}', space=sflag, size = 0x4, scoped, tag = 'scoped memory for tpu_custom_call.1']
    #allocation4 [shape = 's32[1]{0}', space=sflag, size = 0x4, scoped, tag = 'scoped memory for tpu_custom_call.1']
    #allocation5 [shape = 'u8[32768]{0}', space=vmem, size = 0x8000, scoped, tag = 'input window, operand 1, single buffered']
    #allocation6 [shape = 's32[1]{0}', space=sflag, size = 0x4, scoped, tag = 'scoped memory for tpu_custom_call.1']
    #allocation7 [shape = 'u8[32768]{0}', space=vmem, size = 0x8000, scoped, tag = 'input window, operand 3, single buffered']
    #allocation8 [shape = 'u8[32768]{0}', space=vmem, size = 0x8000, scoped, tag = 'input window, operand 5, single buffered']
    #allocation9 [shape = 's32[1]{0}', space=sflag, size = 0x4, scoped, tag = 'scoped memory for tpu_custom_call.1']
    #allocation10 [shape = 'u8[4096]{0}', space=vmem, size = 0x1000, scoped, tag = 'output window, operand 0, single buffered']
    %12 = vsyncpa [#allocation3], 0
    %13 = vsyncpa [#allocation6], 0
    %14 = vsyncpa [#allocation9], 0
    %15 = vsyncpa [#allocation4], 0
    // Predicated region
    $region2: #{tpu_custom_call.1} parent=1 // pred_check
      _
    $region3: #{tpu_custom_call.1} parent=1 // pred_check_branch
      %17 = sbr.rel (0) target = $region5
    $region4: #{tpu_custom_call.1} parent=1 // pred_region
      %19 = vsyncadd [#allocation3], 0
      %s20 = sshll.u32 %s0, 4
      %s21 = int_to_ptr.hbm [resolvable:$true] %s20
      %s22 = sshll.u32 [#allocation2], 4
      %s23 = int_to_ptr.vmem [resolvable:$true] %s22
      %28 = dma.hbm_to_vmem [thread:$0]  %s21, 128, %s23, [#allocation3], 64, 64, 4
    $region5: #{tpu_custom_call.1} parent=1 // pred_fallthru
      _
    // Predicated region
    $region6: #{tpu_custom_call.1} parent=1 // pred_check
      _
    $region7: #{tpu_custom_call.1} parent=1 // pred_check_branch
      %30 = sbr.rel (0) target = $region9
    $region8: #{tpu_custom_call.1} parent=1 // pred_region
      %32 = vsyncadd [#allocation6], 0
      %s33 = sshll.u32 %s1, 4
      %s34 = int_to_ptr.hbm [resolvable:$true] %s33
      %s35 = sshll.u32 [#allocation5], 4
      %s36 = int_to_ptr.vmem [resolvable:$true] %s35
      %41 = dma.hbm_to_vmem [thread:$0]  %s34, 1024, %s36, [#allocation6], 64, 64, 4
    $region9: #{tpu_custom_call.1} parent=1 // pred_fallthru
      _
    // Predicated region
    $region10: #{tpu_custom_call.1} parent=1 // pred_check
      _
    $region11: #{tpu_custom_call.1} parent=1 // pred_check_branch
      %43 = sbr.rel (0) target = $region13
    $region12: #{tpu_custom_call.1} parent=1 // pred_region
      _
    $region13: #{tpu_custom_call.1} parent=1 // pred_fallthru
      _
    // Predicated region
    $region14: #{tpu_custom_call.1} parent=1 // pred_check
      _
    $region15: #{tpu_custom_call.1} parent=1 // pred_check_branch
      %45 = sbr.rel (0) target = $region17
    $region16: #{tpu_custom_call.1} parent=1 // pred_region
      %47 = vsyncadd [#allocation6], 0
      %s48 = sshll.u32 %s3, 4
      %s49 = int_to_ptr.hbm [resolvable:$true] %s48
      %s50 = sshll.u32 [#allocation7], 4
      %s51 = int_to_ptr.vmem [resolvable:$true] %s50
      %56 = dma.hbm_to_vmem [thread:$0]  %s49, 1024, %s51, [#allocation6], 64, 64, 4
    $region17: #{tpu_custom_call.1} parent=1 // pred_fallthru
      _
    // Predicated region
    $region18: #{tpu_custom_call.1} parent=1 // pred_check
      _
    $region19: #{tpu_custom_call.1} parent=1 // pred_check_branch
      %58 = sbr.rel (0) target = $region21
    $region20: #{tpu_custom_call.1} parent=1 // pred_region
      _
    $region21: #{tpu_custom_call.1} parent=1 // pred_fallthru
      _
    // Predicated region
    $region22: #{tpu_custom_call.1} parent=1 // pred_check
      _
    $region23: #{tpu_custom_call.1} parent=1 // pred_check_branch
      %60 = sbr.rel (0) target = $region25
    $region24: #{tpu_custom_call.1} parent=1 // pred_region
      %62 = vsyncadd [#allocation9], 0
      %s63 = sshll.u32 %s5, 4
      %s64 = int_to_ptr.hbm [resolvable:$true] %s63
      %s65 = sshll.u32 [#allocation8], 4
      %s66 = int_to_ptr.vmem [resolvable:$true] %s65
      %71 = dma.hbm_to_vmem [thread:$0]  %s64, 1024, %s66, [#allocation9], 64, 64, 4
    $region25: #{tpu_custom_call.1} parent=1 // pred_fallthru
      _
    // Predicated region
    $region26: #{tpu_custom_call.1} parent=1 // pred_check
      _
    $region27: #{tpu_custom_call.1} parent=1 // pred_check_branch
      %73 = sbr.rel (0) target = $region29
    $region28: #{tpu_custom_call.1} parent=1 // pred_region
      _
    $region29: #{tpu_custom_call.1} parent=1 // pred_fallthru
      _
    // Predicated region
    $region30: #{tpu_custom_call.1} parent=1 // pred_check
      _
    $region31: #{tpu_custom_call.1} parent=1 // pred_check_branch
      %75 = sbr.rel (0) target = $region33
    $region32: #{tpu_custom_call.1} parent=1 // pred_region
      %77 = dma.done [#allocation3], 128
    $region33: #{tpu_custom_call.1} parent=1 // pred_fallthru
      _
    // Predicated region
    $region34: #{tpu_custom_call.1} parent=1 // pred_check
      _
    $region35: #{tpu_custom_call.1} parent=1 // pred_check_branch
      %79 = sbr.rel (0) target = $region37
    $region36: #{tpu_custom_call.1} parent=1 // pred_region
      %81 = dma.done [#allocation6], 1024
    $region37: #{tpu_custom_call.1} parent=1 // pred_fallthru
      _
    // Predicated region
    $region38: #{tpu_custom_call.1} parent=1 // pred_check
      _
    $region39: #{tpu_custom_call.1} parent=1 // pred_check_branch
      %83 = sbr.rel (0) target = $region41
    $region40: #{tpu_custom_call.1} parent=1 // pred_region
      %85 = dma.done [#allocation6], 1024
    $region41: #{tpu_custom_call.1} parent=1 // pred_fallthru
      _
    // Predicated region
    $region42: #{tpu_custom_call.1} parent=1 // pred_check
      _
    $region43: #{tpu_custom_call.1} parent=1 // pred_check_branch
      %87 = sbr.rel (0) target = $region45
    $region44: #{tpu_custom_call.1} parent=1 // pred_region
      %89 = dma.done [#allocation9], 1024
    $region45: #{tpu_custom_call.1} parent=1 // pred_fallthru
      _
    %v90 = vld [vmem:[#allocation2] sm:$0xf]
    %v91 = vld [vmem:[#allocation2 + $0x4] sm:$0xf]
    %v92 = vld [vmem:[#allocation5] sm:$0xf]
    %v93 = vld [vmem:[#allocation5 + $0x4] sm:$0xf]
    %v94 = vld [vmem:[#allocation5 + $0x8] sm:$0xf]
    %v95 = vld [vmem:[#allocation5 + $0xc] sm:$0xf]
    %v96 = vld [vmem:[#allocation5 + $0x10] sm:$0xf]
    %v97 = vld [vmem:[#allocation5 + $0x14] sm:$0xf]
    %v98 = vld [vmem:[#allocation5 + $0x18] sm:$0xf]
    %v99 = vld [vmem:[#allocation5 + $0x1c] sm:$0xf]
    %v100 = vld [vmem:[#allocation5 + $0x20] sm:$0xf]
    %v101 = vld [vmem:[#allocation5 + $0x24] sm:$0xf]
    %v102 = vld [vmem:[#allocation5 + $0x28] sm:$0xf]
    %v103 = vld [vmem:[#allocation5 + $0x2c] sm:$0xf]
    %v104 = vld [vmem:[#allocation5 + $0x30] sm:$0xf]
    %v105 = vld [vmem:[#allocation5 + $0x34] sm:$0xf]
    %v106 = vld [vmem:[#allocation5 + $0x38] sm:$0xf]
    %v107 = vld [vmem:[#allocation5 + $0x3c] sm:$0xf]
    %v108 = vld [vmem:[%s2] sm:$0x1]
    %v110 = vperm.slane %v108, 0
    %v114 = vunpack.c.l.b16 %v90
    %v115 = vunpack.c.l.b16 %v91
    %v116 = vpack.c.b16 %v115, %v114
    %v134 = vunpack.c.l.b16 %v92
    %v135 = vunpack.c.l.b16 %v93
    %v136 = vunpack.c.l.b16 %v94
    %v137 = vunpack.c.l.b16 %v95
    %v138 = vunpack.c.l.b16 %v96
    %v139 = vunpack.c.l.b16 %v97
    %v140 = vunpack.c.l.b16 %v98
    %v141 = vunpack.c.l.b16 %v99
    %v142 = vunpack.c.l.b16 %v100
    %v143 = vunpack.c.l.b16 %v101
    %v144 = vunpack.c.l.b16 %v102
    %v145 = vunpack.c.l.b16 %v103
    %v146 = vunpack.c.l.b16 %v104
    %v147 = vunpack.c.l.b16 %v105
    %v148 = vunpack.c.l.b16 %v106
    %v149 = vunpack.c.l.b16 %v107
    %v150 = vpack.c.b16 %v135, %v134
    %v151 = vpack.c.b16 %v137, %v136
    %v152 = vpack.c.b16 %v139, %v138
    %v153 = vpack.c.b16 %v141, %v140
    %v154 = vpack.c.b16 %v143, %v142
    %v155 = vpack.c.b16 %v145, %v144
    %v156 = vpack.c.b16 %v147, %v146
    %v157 = vpack.c.b16 %v149, %v148
    %166 = vmatpush.bf16.msra.mxu0 %v157
    %167 = vmatpush.bf16.msra.mxu0 %v156
    %168 = vmatpush.bf16.msra.mxu0 %v155
    %169 = vmatpush.bf16.msra.mxu0 %v154
    %170 = vmatpush.bf16.msra.mxu0 %v153
    %171 = vmatpush.bf16.msra.mxu0 %v152
    %172 = vmatpush.bf16.msra.mxu0 %v151
    %173 = vmatpush.bf16.msra.mxu0 %v150
    %174 = vmatmul.bf16.gmra.mxu0 %v116
    %v175 = vpop.f32.mrf.mxu0
    %v176 = vadd.f32 %v110, %v175
    %v177 = vpop.f32.mrf.mxu0
    %v178 = vadd.f32 %v110, %v177
    %179 = vdwg.mxu0
    %v180 = vmax.f32 %v176, 0.0
    %v181 = vmax.f32 %v178, 0.0
    %v182 = vpack.c.bf16 %v181, %v180
    %v183 = vld [vmem:[#allocation7] sm:$0xf]
    %v184 = vld [vmem:[#allocation7 + $0x4] sm:$0xf]
    %v185 = vld [vmem:[#allocation7 + $0x8] sm:$0xf]
    %v186 = vld [vmem:[#allocation7 + $0xc] sm:$0xf]
    %v187 = vld [vmem:[#allocation7 + $0x10] sm:$0xf]
    %v188 = vld [vmem:[#allocation7 + $0x14] sm:$0xf]
    %v189 = vld [vmem:[#allocation7 + $0x18] sm:$0xf]
    %v190 = vld [vmem:[#allocation7 + $0x1c] sm:$0xf]
    %v191 = vld [vmem:[#allocation7 + $0x20] sm:$0xf]
    %v192 = vld [vmem:[#allocation7 + $0x24] sm:$0xf]
    %v193 = vld [vmem:[#allocation7 + $0x28] sm:$0xf]
    %v194 = vld [vmem:[#allocation7 + $0x2c] sm:$0xf]
    %v195 = vld [vmem:[#allocation7 + $0x30] sm:$0xf]
    %v196 = vld [vmem:[#allocation7 + $0x34] sm:$0xf]
    %v197 = vld [vmem:[#allocation7 + $0x38] sm:$0xf]
    %v198 = vld [vmem:[#allocation7 + $0x3c] sm:$0xf]
    %v199 = vld [vmem:[%s4] sm:$0x1]
    %v201 = vperm.slane %v199, 0
    %v219 = vunpack.c.l.b16 %v183
    %v220 = vunpack.c.l.b16 %v184
    %v221 = vunpack.c.l.b16 %v185
    %v222 = vunpack.c.l.b16 %v186
    %v223 = vunpack.c.l.b16 %v187
    %v224 = vunpack.c.l.b16 %v188
    %v225 = vunpack.c.l.b16 %v189
    %v226 = vunpack.c.l.b16 %v190
    %v227 = vunpack.c.l.b16 %v191
    %v228 = vunpack.c.l.b16 %v192
    %v229 = vunpack.c.l.b16 %v193
    %v230 = vunpack.c.l.b16 %v194
    %v231 = vunpack.c.l.b16 %v195
    %v232 = vunpack.c.l.b16 %v196
    %v233 = vunpack.c.l.b16 %v197
    %v234 = vunpack.c.l.b16 %v198
    %v235 = vpack.c.b16 %v220, %v219
    %v236 = vpack.c.b16 %v222, %v221
    %v237 = vpack.c.b16 %v224, %v223
    %v238 = vpack.c.b16 %v226, %v225
    %v239 = vpack.c.b16 %v228, %v227
    %v240 = vpack.c.b16 %v230, %v229
    %v241 = vpack.c.b16 %v232, %v231
    %v242 = vpack.c.b16 %v234, %v233
    %251 = vmatpush.bf16.msra.mxu0 %v242
    %252 = vmatpush.bf16.msra.mxu0 %v241
    %253 = vmatpush.bf16.msra.mxu0 %v240
    %254 = vmatpush.bf16.msra.mxu0 %v239
    %255 = vmatpush.bf16.msra.mxu0 %v238
    %256 = vmatpush.bf16.msra.mxu0 %v237
    %257 = vmatpush.bf16.msra.mxu0 %v236
    %258 = vmatpush.bf16.msra.mxu0 %v235
    %259 = vmatmul.bf16.gmra.mxu0 %v182
    %v260 = vpop.f32.mrf.mxu0
    %v261 = vadd.f32 %v201, %v260
    %v262 = vpop.f32.mrf.mxu0
    %v263 = vadd.f32 %v201, %v262
    %264 = vdwg.mxu0
    %v265 = vmax.f32 %v261, 0.0
    %v266 = vmax.f32 %v263, 0.0
    %v267 = vpack.c.bf16 %v266, %v265
    %v268 = vld [vmem:[#allocation8] sm:$0xf]
    %v269 = vld [vmem:[#allocation8 + $0x4] sm:$0xf]
    %v270 = vld [vmem:[#allocation8 + $0x8] sm:$0xf]
    %v271 = vld [vmem:[#allocation8 + $0xc] sm:$0xf]
    %v272 = vld [vmem:[#allocation8 + $0x10] sm:$0xf]
    %v273 = vld [vmem:[#allocation8 + $0x14] sm:$0xf]
    %v274 = vld [vmem:[#allocation8 + $0x18] sm:$0xf]
    %v275 = vld [vmem:[#allocation8 + $0x1c] sm:$0xf]
    %v276 = vld [vmem:[#allocation8 + $0x20] sm:$0xf]
    %v277 = vld [vmem:[#allocation8 + $0x24] sm:$0xf]
    %v278 = vld [vmem:[#allocation8 + $0x28] sm:$0xf]
    %v279 = vld [vmem:[#allocation8 + $0x2c] sm:$0xf]
    %v280 = vld [vmem:[#allocation8 + $0x30] sm:$0xf]
    %v281 = vld [vmem:[#allocation8 + $0x34] sm:$0xf]
    %v282 = vld [vmem:[#allocation8 + $0x38] sm:$0xf]
    %v283 = vld [vmem:[#allocation8 + $0x3c] sm:$0xf]
    %v284 = vld [vmem:[%s6] sm:$0x1]
    %v286 = vperm.slane %v284, 0
    %v304 = vunpack.c.l.b16 %v268
    %v305 = vunpack.c.l.b16 %v269
    %v306 = vunpack.c.l.b16 %v270
    %v307 = vunpack.c.l.b16 %v271
    %v308 = vunpack.c.l.b16 %v272
    %v309 = vunpack.c.l.b16 %v273
    %v310 = vunpack.c.l.b16 %v274
    %v311 = vunpack.c.l.b16 %v275
    %v312 = vunpack.c.l.b16 %v276
    %v313 = vunpack.c.l.b16 %v277
    %v314 = vunpack.c.l.b16 %v278
    %v315 = vunpack.c.l.b16 %v279
    %v316 = vunpack.c.l.b16 %v280
    %v317 = vunpack.c.l.b16 %v281
    %v318 = vunpack.c.l.b16 %v282
    %v319 = vunpack.c.l.b16 %v283
    %v320 = vpack.c.b16 %v305, %v304
    %v321 = vpack.c.b16 %v307, %v306
    %v322 = vpack.c.b16 %v309, %v308
    %v323 = vpack.c.b16 %v311, %v310
    %v324 = vpack.c.b16 %v313, %v312
    %v325 = vpack.c.b16 %v315, %v314
    %v326 = vpack.c.b16 %v317, %v316
    %v327 = vpack.c.b16 %v319, %v318
    %336 = vmatpush.bf16.msra.mxu0 %v327
    %337 = vmatpush.bf16.msra.mxu0 %v326
    %338 = vmatpush.bf16.msra.mxu0 %v325
    %339 = vmatpush.bf16.msra.mxu0 %v324
    %340 = vmatpush.bf16.msra.mxu0 %v323
    %341 = vmatpush.bf16.msra.mxu0 %v322
    %342 = vmatpush.bf16.msra.mxu0 %v321
    %343 = vmatpush.bf16.msra.mxu0 %v320
    %344 = vmatmul.bf16.gmra.mxu0 %v267
    %v345 = vpop.f32.mrf.mxu0
    %v346 = vadd.f32 %v286, %v345
    %v347 = vpop.f32.mrf.mxu0
    %v348 = vadd.f32 %v286, %v347
    %349 = vdwg.mxu0
    %v350 = vtanh.pop %v346
    %v351 = vtanh.pop %v348
    %v352 = vpack.c.bf16 %v350, %v350
    %v353 = vpack.c.bf16 %v351, %v351
    %354 = vst [vmem:[#allocation10] sm:$0xf] %v352
    %355 = vst [vmem:[#allocation10 + $0x4] sm:$0xf] %v353
    // Predicated region
    $region46: #{tpu_custom_call.1} parent=1 // pred_check
      _
    $region47: #{tpu_custom_call.1} parent=1 // pred_check_branch
      %357 = sbr.rel (0) target = $region49
    $region48: #{tpu_custom_call.1} parent=1 // pred_region
      %359 = vsyncadd [#allocation4], 0
      %s360 = sshll.u32 [#allocation10], 4
      %s361 = int_to_ptr.vmem [resolvable:$true] %s360
      %s362 = sshll.u32 %s7, 4
      %s363 = int_to_ptr.hbm [resolvable:$true] %s362
      %368 = dma.vmem_to_hbm [thread:$0]  %s361, 128, %s363, [#allocation4], 64, 64, 4
    $region49: #{tpu_custom_call.1} parent=1 // pred_fallthru
      _
    // Predicated region
    $region50: #{tpu_custom_call.1} parent=1 // pred_check
      _
    $region51: #{tpu_custom_call.1} parent=1 // pred_check_branch
      %370 = sbr.rel (0) target = $region53
    $region52: #{tpu_custom_call.1} parent=1 // pred_region
      %372 = dma.done [#allocation4], 128
    $region53: #{tpu_custom_call.1} parent=1 // pred_fallthru
      _
    %373 = vsyncpa [#allocation3], 1
    %374 = vsyncpa [#allocation6], 1
    %375 = vsyncpa [#allocation9], 1
    %376 = vsyncpa [#allocation4], 1

</llo_original>
